<compile_context>
chip_gen: v7x
topology: tpu7x:2x2x1
jax: 0.10.0
libtpu: 0.0.40
codegen_flags: <defaults>
</compile_context>

<pallas_src>
import functools

import jax
import jax.numpy as jnp
from jax.experimental import pallas as pl
from jax.experimental.pallas import tpu as pltpu

LANE = 128  # TPU lane width; hidden dims are padded to this so matmuls are aligned.


def _round_up(n, m):
    return (n + m - 1) // m * m


def _choose_tile_b(B):
    """Pick the batch tile: rows multiple of 8 (sublane), >= 2 grid steps whenever
    possible (so v7x's two TensorCores both get work), capped at 512 rows for large B
    to amortize per-grid-step overhead without needing vmem_limit_bytes anywhere."""
    if B <= 16:
        return _round_up(max(B, 8), 8)       # tiny batch: single tile
    if B <= 1024:
        return _round_up(-(-B // 2), 8)      # two tiles
    return 512                               # large batch: 512-row tiles, grid >= 3


def net_tanh_kernel(x_ref, w1_ref, b1_ref, w2_ref, b2_ref, w3_ref, b3_ref, out_ref):
    # x streamed as raw f32; cast to bf16 here, right before the first MXU matmul.
    x = x_ref[...].astype(jnp.bfloat16)
    # layer 1: bf16 MXU matmul (K = D_in, unpadded), f32 accumulate + bias + tanh
    h1 = jnp.tanh(
        jnp.dot(x, w1_ref[...], preferred_element_type=jnp.float32) + b1_ref[...]
    )
    # layer 2
    h2 = jnp.tanh(
        jnp.dot(h1.astype(jnp.bfloat16), w2_ref[...],
                preferred_element_type=jnp.float32) + b2_ref[...]
    )
    # layer 3 (no activation, matches the PyTorch forward); output is D_out-wide f32
    out_ref[...] = (
        jnp.dot(h2.astype(jnp.bfloat16), w3_ref[...],
                preferred_element_type=jnp.float32) + b3_ref[...]
    ).astype(out_ref.dtype)


def prepare_params(w1, b1, w2, b2, w3, b3):
    """One-time parameter prep: transpose PyTorch (out,in) weights to (in,out), pad
    only the *hidden* dims to 128 lanes (layer-1 K stays D_in, layer-3 N stays D_out),
    cast weights to bf16 (MXU-native), keep biases in f32 as (1, out) rows."""
    H1, D_in = w1.shape
    H2, _ = w2.shape
    D_out, _ = w3.shape
    H1p, H2p = _round_up(H1, LANE), _round_up(H2, LANE)

    def prep(w, b, in_p, out_p):
        fan_out, fan_in = w.shape
        wt = jnp.zeros((in_p, out_p), jnp.float32).at[:fan_in, :fan_out].set(w.T)
        bp = jnp.zeros((1, out_p), jnp.float32).at[0, :fan_out].set(b)
        return wt.astype(jnp.bfloat16), bp

    w1t, b1p = prep(w1, b1, D_in, H1p)     # (D_in, 128): raw x feeds it, K unpadded
    w2t, b2p = prep(w2, b2, H1p, H2p)      # (128, 128)
    w3t, b3p = prep(w3, b3, H2p, D_out)    # (128, D_out): output stays D_out-wide
    return (w1t, b1p, w2t, b2p, w3t, b3p)


@functools.partial(jax.jit, static_argnames=("tile_b",))
def net_tanh_forward(x, params, tile_b=None):
    """x: (B, D_in) float32; params: output of prepare_params. Returns (B, D_out) f32."""
    w1t, b1p, w2t, b2p, w3t, b3p = params
    B, D_in = x.shape
    D_out = w3t.shape[1]

    if tile_b is None:
        tile_b = _choose_tile_b(B)          # x.shape is static at trace time
    B_pad = _round_up(B, tile_b)

    # Only pad rows (no lane pad, no host cast); a no-op when B is already aligned.
    x_in = x if B_pad == B else jnp.zeros((B_pad, D_in), x.dtype).at[:B].set(x)

    grid = (B_pad // tile_b,)
    const = lambda i: (0, 0)                # weights/biases stay VMEM-resident

    # Cost estimate with the real (unpadded K=64 / D_out-wide) numbers.
    flops = 2 * B_pad * (
        w1t.shape[0] * w1t.shape[1]
        + w2t.shape[0] * w2t.shape[1]
        + w3t.shape[0] * w3t.shape[1]
    )
    transcendentals = B_pad * (w1t.shape[1] + w2t.shape[1])   # tanh evaluations
    bytes_accessed = (
        B_pad * D_in * 4                                      # x (f32, unpadded lanes)
        + sum(w.size * 2 for w in (w1t, w2t, w3t))            # bf16 weights
        + sum(b.size * 4 for b in (b1p, b2p, b3p))            # f32 biases
        + B_pad * D_out * 4                                   # f32 output, D_out-wide
    )

    out_pad = pl.pallas_call(
        net_tanh_kernel,
        out_shape=jax.ShapeDtypeStruct((B_pad, D_out), jnp.float32),
        grid=grid,
        in_specs=[
            # x: streamed per batch tile; last dim == full array dim (legal, < 128 OK)
            pl.BlockSpec((tile_b, D_in), lambda i: (i, 0)),
            pl.BlockSpec(w1t.shape, const),
            pl.BlockSpec(b1p.shape, const),
            pl.BlockSpec(w2t.shape, const),
            pl.BlockSpec(b2p.shape, const),
            pl.BlockSpec(w3t.shape, const),
            pl.BlockSpec(b3p.shape, const),
        ],
        out_specs=pl.BlockSpec((tile_b, D_out), lambda i: (i, 0)),
        compiler_params=pltpu.CompilerParams(
            dimension_semantics=("parallel",),   # megacore sharding on v7x
        ),
        cost_estimate=pl.CostEstimate(
            flops=flops,
            transcendentals=transcendentals,
            bytes_accessed=bytes_accessed,
        ),
    )(x_in, w1t, b1p, w2t, b2p, w3t, b3p)

    return out_pad[:B] if B_pad != B else out_pad


def init_linear(key, fan_in, fan_out):
    """Deterministic init mimicking torch.nn.Linear default (uniform +/- 1/sqrt(fan_in))."""
    kw, kb = jax.random.split(key)
    bound = 1.0 / jnp.sqrt(jnp.float32(fan_in))
    w = jax.random.uniform(kw, (fan_out, fan_in), jnp.float32, -bound, bound)
    b = jax.random.uniform(kb, (fan_out,), jnp.float32, -bound, bound)
    return w, b


def reference_forward_f32(x, w1, b1, w2, b2, w3, b3):
    h1 = jnp.tanh(x @ w1.T + b1)
    h2 = jnp.tanh(h1 @ w2.T + b2)
    return h2 @ w3.T + b3


def reference_forward_matched(x, w1, b1, w2, b2, w3, b3):
    """Same math as the kernel: bf16 MXU inputs, f32 accumulation/bias/tanh."""
    bf = lambda a: a.astype(jnp.bfloat16).astype(jnp.float32)
    h1 = jnp.tanh(bf(x) @ bf(w1.T) + b1)
    h2 = jnp.tanh(bf(h1) @ bf(w2.T) + b2)
    return bf(h2) @ bf(w3.T) + b3


if __name__ == "__main__":
    # Small MLP shapes consistent with the module: D_in -> H1 -> H2 -> D_out.
    B, D_in, H1, H2, D_out = 256, 64, 32, 32, 10

    key = jax.random.PRNGKey(0)
    kx, k1, k2, k3 = jax.random.split(key, 4)

    x = jax.random.normal(kx, (B, D_in), jnp.float32)
    w1, b1 = init_linear(k1, D_in, H1)
    w2, b2 = init_linear(k2, H1, H2)
    w3, b3 = init_linear(k3, H2, D_out)

    params = prepare_params(w1, b1, w2, b2, w3, b3)   # one-time prep (transpose/pad/bf16)

    out = net_tanh_forward(x, params)
    out = jax.block_until_ready(out)
    assert out.shape == (B, D_out)

    # Exact-precision check against a reference that mirrors the kernel's bf16-in/f32-acc math.
    ref_matched = reference_forward_matched(x, w1, b1, w2, b2, w3, b3)
    assert jnp.allclose(out, ref_matched, atol=1e-3, rtol=1e-3), "mismatch vs matched-precision reference"

    # Loose sanity check against the pure-f32 PyTorch-equivalent math.
    ref_f32 = reference_forward_f32(x, w1, b1, w2, b2, w3, b3)
    assert jnp.allclose(out, ref_f32, atol=5e-2, rtol=5e-2), "mismatch vs f32 reference"

    print("KERNEL_OK")
</pallas_src>

<mosaic_0001>
module attributes {stable_mosaic.version = 11 : i64} {
  func.func @net_tanh_kernel(%arg0: i32, %arg1: memref<128x64xf32, #tpu.memory_space<vmem>>, %arg2: memref<64x128xbf16, #tpu.memory_space<vmem>>, %arg3: memref<1x128xf32, #tpu.memory_space<vmem>>, %arg4: memref<128x128xbf16, #tpu.memory_space<vmem>>, %arg5: memref<1x128xf32, #tpu.memory_space<vmem>>, %arg6: memref<128x10xbf16, #tpu.memory_space<vmem>>, %arg7: memref<1x10xf32, #tpu.memory_space<vmem>>, %arg8: memref<128x10xf32, #tpu.memory_space<vmem>>) attributes {dimension_semantics = [#tpu.dimension_semantics<parallel>], iteration_bounds = array<i64: 2>, scalar_prefetch = 0 : i64, scratch_operands = 0 : i64, tpu.core_type = #tpu.core_type<tc>, window_params = [{transform_indices = @transform_0, window_bounds = array<i64: 128, 64>}, {pipeline_mode = #tpu.pipeline_mode<synchronous>, transform_indices = @transform_1, window_bounds = array<i64: 64, 128>}, {pipeline_mode = #tpu.pipeline_mode<synchronous>, transform_indices = @transform_2, window_bounds = array<i64: 1, 128>}, {pipeline_mode = #tpu.pipeline_mode<synchronous>, transform_indices = @transform_3, window_bounds = array<i64: 128, 128>}, {pipeline_mode = #tpu.pipeline_mode<synchronous>, transform_indices = @transform_4, window_bounds = array<i64: 1, 128>}, {pipeline_mode = #tpu.pipeline_mode<synchronous>, transform_indices = @transform_5, window_bounds = array<i64: 128, 10>}, {pipeline_mode = #tpu.pipeline_mode<synchronous>, transform_indices = @transform_6, window_bounds = array<i64: 1, 10>}, {transform_indices = @transform_7, window_bounds = array<i64: 128, 10>}]} {
    %c0 = arith.constant 0 : index
    %c0_0 = arith.constant 0 : index
    %0 = vector.load %arg1[%c0, %c0_0] : memref<128x64xf32, #tpu.memory_space<vmem>>, vector<128x64xf32>
    %1 = arith.truncf %0 : vector<128x64xf32> to vector<128x64xbf16>
    %c0_1 = arith.constant 0 : index
    %c0_2 = arith.constant 0 : index
    %2 = vector.load %arg2[%c0_1, %c0_2] : memref<64x128xbf16, #tpu.memory_space<vmem>>, vector<64x128xbf16>
    %cst = arith.constant dense<0.000000e+00> : vector<128x128xf32>
    %3 = tpu.matmul %1, %2, %cst {dimension_numbers = #tpu.dot_dimension_numbers<[1], [0], [0], [1], [0, 0, 1, 1], [], []>} : vector<128x64xbf16>, vector<64x128xbf16>, vector<128x128xf32> -> vector<128x128xf32>
    %c0_3 = arith.constant 0 : index
    %c0_4 = arith.constant 0 : index
    %4 = vector.load %arg3[%c0_3, %c0_4] : memref<1x128xf32, #tpu.memory_space<vmem>>, vector<1x128xf32>
    %5 = vector.broadcast %4 : vector<1x128xf32> to vector<128x128xf32>
    %6 = arith.addf %3, %5 : vector<128x128xf32>
    %7 = math.tanh %6 : vector<128x128xf32>
    %8 = arith.truncf %7 : vector<128x128xf32> to vector<128x128xbf16>
    %c0_5 = arith.constant 0 : index
    %c0_6 = arith.constant 0 : index
    %9 = vector.load %arg4[%c0_5, %c0_6] : memref<128x128xbf16, #tpu.memory_space<vmem>>, vector<128x128xbf16>
    %cst_7 = arith.constant dense<0.000000e+00> : vector<128x128xf32>
    %10 = tpu.matmul %8, %9, %cst_7 {dimension_numbers = #tpu.dot_dimension_numbers<[1], [0], [0], [1], [0, 0, 1, 1], [], []>} : vector<128x128xbf16>, vector<128x128xbf16>, vector<128x128xf32> -> vector<128x128xf32>
    %c0_8 = arith.constant 0 : index
    %c0_9 = arith.constant 0 : index
    %11 = vector.load %arg5[%c0_8, %c0_9] : memref<1x128xf32, #tpu.memory_space<vmem>>, vector<1x128xf32>
    %12 = vector.broadcast %11 : vector<1x128xf32> to vector<128x128xf32>
    %13 = arith.addf %10, %12 : vector<128x128xf32>
    %14 = math.tanh %13 : vector<128x128xf32>
    %15 = arith.truncf %14 : vector<128x128xf32> to vector<128x128xbf16>
    %c0_10 = arith.constant 0 : index
    %c0_11 = arith.constant 0 : index
    %16 = vector.load %arg6[%c0_10, %c0_11] : memref<128x10xbf16, #tpu.memory_space<vmem>>, vector<128x10xbf16>
    %cst_12 = arith.constant dense<0.000000e+00> : vector<128x10xf32>
    %17 = tpu.matmul %15, %16, %cst_12 {dimension_numbers = #tpu.dot_dimension_numbers<[1], [0], [0], [1], [0, 0, 1, 1], [], []>} : vector<128x128xbf16>, vector<128x10xbf16>, vector<128x10xf32> -> vector<128x10xf32>
    %c0_13 = arith.constant 0 : index
    %c0_14 = arith.constant 0 : index
    %18 = vector.load %arg7[%c0_13, %c0_14] : memref<1x10xf32, #tpu.memory_space<vmem>>, vector<1x10xf32>
    %19 = vector.broadcast %18 : vector<1x10xf32> to vector<128x10xf32>
    %20 = arith.addf %17, %19 : vector<128x10xf32>
    %c0_15 = arith.constant 0 : index
    %c0_16 = arith.constant 0 : index
    %21 = vector.load %arg8[%c0_15, %c0_16] : memref<128x10xf32, #tpu.memory_space<vmem>>, vector<128x10xf32>
    tpu.vector_store %arg8[%c0_15, %c0_16], %20 {strides = array<i32>} : memref<128x10xf32, #tpu.memory_space<vmem>>, vector<128x10xf32>,
    return
  }
  func.func @transform_0(%arg0: i32) -> (i32, i32) {
    %c0_i32 = arith.constant 0 : i32
    %c0_i32_0 = arith.constant 0 : i32
    return %arg0, %c0_i32 : i32, i32
  }
  func.func @transform_1(%arg0: i32) -> (i32, i32) {
    %c0_i32 = arith.constant 0 : i32
    %c0_i32_0 = arith.constant 0 : i32
    %c0_i32_1 = arith.constant 0 : i32
    return %c0_i32, %c0_i32_0 : i32, i32
  }
  func.func @transform_2(%arg0: i32) -> (i32, i32) {
    %c0_i32 = arith.constant 0 : i32
    %c0_i32_0 = arith.constant 0 : i32
    %c0_i32_1 = arith.constant 0 : i32
    return %c0_i32, %c0_i32_0 : i32, i32
  }
  func.func @transform_3(%arg0: i32) -> (i32, i32) {
    %c0_i32 = arith.constant 0 : i32
    %c0_i32_0 = arith.constant 0 : i32
    %c0_i32_1 = arith.constant 0 : i32
    return %c0_i32, %c0_i32_0 : i32, i32
  }
  func.func @transform_4(%arg0: i32) -> (i32, i32) {
    %c0_i32 = arith.constant 0 : i32
    %c0_i32_0 = arith.constant 0 : i32
    %c0_i32_1 = arith.constant 0 : i32
    return %c0_i32, %c0_i32_0 : i32, i32
  }
  func.func @transform_5(%arg0: i32) -> (i32, i32) {
    %c0_i32 = arith.constant 0 : i32
    %c0_i32_0 = arith.constant 0 : i32
    %c0_i32_1 = arith.constant 0 : i32
    return %c0_i32, %c0_i32_0 : i32, i32
  }
  func.func @transform_6(%arg0: i32) -> (i32, i32) {
    %c0_i32 = arith.constant 0 : i32
    %c0_i32_0 = arith.constant 0 : i32
    %c0_i32_1 = arith.constant 0 : i32
    return %c0_i32, %c0_i32_0 : i32, i32
  }
  func.func @transform_7(%arg0: i32) -> (i32, i32) {
    %c0_i32 = arith.constant 0 : i32
    %c0_i32_0 = arith.constant 0 : i32
    return %arg0, %c0_i32 : i32, i32
  }
}

</mosaic_0001>

<llo_original>
// kernel: net_tanh_forward.1
$region0: #{net_tanh_forward.1}
  #allocation0 [shape = 'u32[]', space=smem, size = 0x4, offset = 0x4, fixed_abs, tag = 'smem constant byte address 0x4 - core index']
  #allocation1 [shape = 'u32[144,128]{1,0:T(1,128)}', space=vmem, size = 0x12000, scoped, tag = 'internal scratch']
  %s0 = inlined_call_operand.vmem [shape: f32[256,64], index: 0, kind: input, shape index: {}]
  %s1 = inlined_call_operand.vmem [shape: bf16[64,128], index: 1, kind: input, shape index: {}]
  %s2 = inlined_call_operand.vmem [shape: f32[1,128], index: 2, kind: input, shape index: {}]
  %s3 = inlined_call_operand.vmem [shape: bf16[128,128], index: 3, kind: input, shape index: {}]
  %s4 = inlined_call_operand.vmem [shape: f32[1,128], index: 4, kind: input, shape index: {}]
  %s5 = inlined_call_operand.vmem [shape: bf16[128,10], index: 5, kind: input, shape index: {}]
  %s6 = inlined_call_operand.vmem [shape: f32[1,10], index: 6, kind: input, shape index: {}]
  %s7 = inlined_call_operand.vmem [shape: f32[256,10], index: 7, kind: output, shape index: {}]
  %s8 = sld [smem:[#allocation0]]
  $region61: #{net_tanh_forward.1} parent=0
    _
  %s10 = ssub.s32 1, %s8
  %s11 = scalar_select 0, %s10, %s8
  loop: start=0, step=1, limit=4
  $region2: #{net_tanh_forward.1} parent=0 // loop_pre_header
    _
  $region3: #{net_tanh_forward.1} parent=0 // loop_header
    %s13 = sphi 0, %s17
    %p14 = scmp.ge.s32.totalorder %s13, 4
    %s23 = sphi 0, %s25
    %s26 = sphi 0, %s23
    %s27 = sphi 0, %s26
    %s43 = sphi 0, %s27
    %s47 = sphi 0, %s47
    %s49 = sphi 0, %s47
    %s50 = sphi 0, %s49
    %s64 = sphi 0, %s50
    %s68 = sphi 0, %s68
    %s70 = sphi 0, %s68
    %s71 = sphi 0, %s70
    %s85 = sphi 0, %s71
    %s89 = sphi 0, %s89
    %s91 = sphi 0, %s89
    %s92 = sphi 0, %s91
    %s106 = sphi 0, %s92
    %s110 = sphi 0, %s110
    %s112 = sphi 0, %s110
    %s113 = sphi 0, %s112
    %s127 = sphi 0, %s113
    %s131 = sphi 0, %s131
    %s133 = sphi 0, %s131
    %s134 = sphi 0, %s133
    %s148 = sphi 0, %s134
    %s152 = sphi 0, %s152
    %s154 = sphi 0, %s152
    %s155 = sphi 0, %s154
    %s169 = sphi 0, %s155
    %s175 = sphi 0, %s177
    %s178 = sphi 0, %s175
    %s179 = sphi 0, %s178
    %s195 = sphi 0, %s179
  $region4: #{net_tanh_forward.1} parent=0 // loop_header_branch
    %16 = sbr.rel (%p14) target = $region8
  $region5: #{net_tanh_forward.1} parent=0 // loop_body
    %s18 = ssub.s32 %s13, 1
    %s19 = ssub.s32 %s13, 2
    %s20 = sadd.s32 %s13, 1
    %s21 = ssub.s32 %s13, %s20
    %p22 = scmp.eq.s32.totalorder %s21, 0
    %s24 = sadd.s32 %s23, 1
    %s25 = scalar_select %p22, %s23, %s24
    %p28 = pneg %p22
    %p29 = scmp.eq.s32.totalorder %s13, 1
    %p30 = por %p28, %p29
    %p31 = scmp.ne.s32.totalorder %s23, %s26
    %p32 = scmp.eq.s32.totalorder %s13, 0
    %p33 = por %p31, %p32
    %p34 = scmp.ne.s32.totalorder %s23, %s26
    %p35 = scmp.eq.s32.totalorder %s18, 1
    %p36 = por %p34, %p35
    %p37 = scmp.ne.s32.totalorder %s26, %s27
    %p38 = scmp.eq.s32.totalorder %s18, 0
    %p39 = por %p37, %p38
    %p40 = scmp.ne.s32.totalorder %s26, %s27
    %p41 = scmp.eq.s32.totalorder %s19, 1
    %p42 = por %p40, %p41
    %p44 = scmp.ne.s32.totalorder %s27, %s43
    %p45 = scmp.eq.s32.totalorder %s19, 0
    %p46 = por %p44, %p45
    %s48 = sadd.s32 %s47, 1
    %p51 = scmp.eq.s32.totalorder %s13, 1
    %p52 = scmp.ne.s32.totalorder %s47, %s49
    %p53 = scmp.eq.s32.totalorder %s13, 0
    %p54 = por %p52, %p53
    %p55 = scmp.ne.s32.totalorder %s47, %s49
    %p56 = scmp.eq.s32.totalorder %s18, 1
    %p57 = por %p55, %p56
    %p58 = scmp.ne.s32.totalorder %s49, %s50
    %p59 = scmp.eq.s32.totalorder %s18, 0
    %p60 = por %p58, %p59
    %p61 = scmp.ne.s32.totalorder %s49, %s50
    %p62 = scmp.eq.s32.totalorder %s19, 1
    %p63 = por %p61, %p62
    %p65 = scmp.ne.s32.totalorder %s50, %s64
    %p66 = scmp.eq.s32.totalorder %s19, 0
    %p67 = por %p65, %p66
    %s69 = sadd.s32 %s68, 1
    %p72 = scmp.eq.s32.totalorder %s13, 1
    %p73 = scmp.ne.s32.totalorder %s68, %s70
    %p74 = scmp.eq.s32.totalorder %s13, 0
    %p75 = por %p73, %p74
    %p76 = scmp.ne.s32.totalorder %s68, %s70
    %p77 = scmp.eq.s32.totalorder %s18, 1
    %p78 = por %p76, %p77
    %p79 = scmp.ne.s32.totalorder %s70, %s71
    %p80 = scmp.eq.s32.totalorder %s18, 0
    %p81 = por %p79, %p80
    %p82 = scmp.ne.s32.totalorder %s70, %s71
    %p83 = scmp.eq.s32.totalorder %s19, 1
    %p84 = por %p82, %p83
    %p86 = scmp.ne.s32.totalorder %s71, %s85
    %p87 = scmp.eq.s32.totalorder %s19, 0
    %p88 = por %p86, %p87
    %s90 = sadd.s32 %s89, 1
    %p93 = scmp.eq.s32.totalorder %s13, 1
    %p94 = scmp.ne.s32.totalorder %s89, %s91
    %p95 = scmp.eq.s32.totalorder %s13, 0
    %p96 = por %p94, %p95
    %p97 = scmp.ne.s32.totalorder %s89, %s91
    %p98 = scmp.eq.s32.totalorder %s18, 1
    %p99 = por %p97, %p98
    %p100 = scmp.ne.s32.totalorder %s91, %s92
    %p101 = scmp.eq.s32.totalorder %s18, 0
    %p102 = por %p100, %p101
    %p103 = scmp.ne.s32.totalorder %s91, %s92
    %p104 = scmp.eq.s32.totalorder %s19, 1
    %p105 = por %p103, %p104
    %p107 = scmp.ne.s32.totalorder %s92, %s106
    %p108 = scmp.eq.s32.totalorder %s19, 0
    %p109 = por %p107, %p108
    %s111 = sadd.s32 %s110, 1
    %p114 = scmp.eq.s32.totalorder %s13, 1
    %p115 = scmp.ne.s32.totalorder %s110, %s112
    %p116 = scmp.eq.s32.totalorder %s13, 0
    %p117 = por %p115, %p116
    %p118 = scmp.ne.s32.totalorder %s110, %s112
    %p119 = scmp.eq.s32.totalorder %s18, 1
    %p120 = por %p118, %p119
    %p121 = scmp.ne.s32.totalorder %s112, %s113
    %p122 = scmp.eq.s32.totalorder %s18, 0
    %p123 = por %p121, %p122
    %p124 = scmp.ne.s32.totalorder %s112, %s113
    %p125 = scmp.eq.s32.totalorder %s19, 1
    %p126 = por %p124, %p125
    %p128 = scmp.ne.s32.totalorder %s113, %s127
    %p129 = scmp.eq.s32.totalorder %s19, 0
    %p130 = por %p128, %p129
    %s132 = sadd.s32 %s131, 1
    %p135 = scmp.eq.s32.totalorder %s13, 1
    %p136 = scmp.ne.s32.totalorder %s131, %s133
    %p137 = scmp.eq.s32.totalorder %s13, 0
    %p138 = por %p136, %p137
    %p139 = scmp.ne.s32.totalorder %s131, %s133
    %p140 = scmp.eq.s32.totalorder %s18, 1
    %p141 = por %p139, %p140
    %p142 = scmp.ne.s32.totalorder %s133, %s134
    %p143 = scmp.eq.s32.totalorder %s18, 0
    %p144 = por %p142, %p143
    %p145 = scmp.ne.s32.totalorder %s133, %s134
    %p146 = scmp.eq.s32.totalorder %s19, 1
    %p147 = por %p145, %p146
    %p149 = scmp.ne.s32.totalorder %s134, %s148
    %p150 = scmp.eq.s32.totalorder %s19, 0
    %p151 = por %p149, %p150
    %s153 = sadd.s32 %s152, 1
    %p156 = scmp.eq.s32.totalorder %s13, 1
    %p157 = scmp.ne.s32.totalorder %s152, %s154
    %p158 = scmp.eq.s32.totalorder %s13, 0
    %p159 = por %p157, %p158
    %p160 = scmp.ne.s32.totalorder %s152, %s154
    %p161 = scmp.eq.s32.totalorder %s18, 1
    %p162 = por %p160, %p161
    %p163 = scmp.ne.s32.totalorder %s154, %s155
    %p164 = scmp.eq.s32.totalorder %s18, 0
    %p165 = por %p163, %p164
    %p166 = scmp.ne.s32.totalorder %s154, %s155
    %p167 = scmp.eq.s32.totalorder %s19, 1
    %p168 = por %p166, %p167
    %p170 = scmp.ne.s32.totalorder %s155, %s169
    %p171 = scmp.eq.s32.totalorder %s19, 0
    %p172 = por %p170, %p171
    %s173 = ssub.s32 %s13, %s20
    %p174 = scmp.eq.s32.totalorder %s173, 0
    %s176 = sadd.s32 %s175, 1
    %s177 = scalar_select %p174, %s175, %s176
    %p180 = pneg %p174
    %p181 = scmp.eq.s32.totalorder %s13, 1
    %p182 = por %p180, %p181
    %p183 = scmp.ne.s32.totalorder %s175, %s178
    %p184 = scmp.eq.s32.totalorder %s13, 0
    %p185 = por %p183, %p184
    %p186 = scmp.ne.s32.totalorder %s175, %s178
    %p187 = scmp.eq.s32.totalorder %s18, 1
    %p188 = por %p186, %p187
    %p189 = scmp.ne.s32.totalorder %s178, %s179
    %p190 = scmp.eq.s32.totalorder %s18, 0
    %p191 = por %p189, %p190
    %p192 = scmp.ne.s32.totalorder %s178, %s179
    %p193 = scmp.eq.s32.totalorder %s19, 1
    %p194 = por %p192, %p193
    %p196 = scmp.ne.s32.totalorder %s179, %s195
    %p197 = scmp.eq.s32.totalorder %s19, 0
    %p198 = por %p196, %p197
    %p199 = scmp.le.s32.totalorder 1, %s13
    %p200 = scmp.lt.s32.totalorder %s13, 3
    %p201 = pnand %p199, %p200
    %p202 = pneg %p201
    // Predicated region
    $region9: #{net_tanh_forward.1} parent=5 // pred_check
      _
    $region10: #{net_tanh_forward.1} parent=5 // pred_check_branch
      %204 = sbr.rel (%p201) target = $region12
    $region11: #{net_tanh_forward.1} parent=5 // pred_region
      %s205 = ssub.s32 %s13, 1
      // Predicated region
      $region13: #{net_tanh_forward.1} parent=11 // pred_check
        %p206 = pneg %p60
      $region14: #{net_tanh_forward.1} parent=11 // pred_check_branch
        %208 = sbr.rel (%p206) target = $region16
      $region15: #{net_tanh_forward.1} parent=11 // pred_region
        _
      $region16: #{net_tanh_forward.1} parent=11 // pred_fallthru
        _
      // Predicated region
      $region17: #{net_tanh_forward.1} parent=11 // pred_check
        %p209 = pneg %p81
      $region18: #{net_tanh_forward.1} parent=11 // pred_check_branch
        %211 = sbr.rel (%p209) target = $region20
      $region19: #{net_tanh_forward.1} parent=11 // pred_region
        _
      $region20: #{net_tanh_forward.1} parent=11 // pred_fallthru
        _
      // Predicated region
      $region21: #{net_tanh_forward.1} parent=11 // pred_check
        %p212 = pneg %p102
      $region22: #{net_tanh_forward.1} parent=11 // pred_check_branch
        %214 = sbr.rel (%p212) target = $region24
      $region23: #{net_tanh_forward.1} parent=11 // pred_region
        _
      $region24: #{net_tanh_forward.1} parent=11 // pred_fallthru
        _
      // Predicated region
      $region25: #{net_tanh_forward.1} parent=11 // pred_check
        %p215 = pneg %p123
      $region26: #{net_tanh_forward.1} parent=11 // pred_check_branch
        %217 = sbr.rel (%p215) target = $region28
      $region27: #{net_tanh_forward.1} parent=11 // pred_region
        _
      $region28: #{net_tanh_forward.1} parent=11 // pred_fallthru
        _
      // Predicated region
      $region29: #{net_tanh_forward.1} parent=11 // pred_check
        %p218 = pneg %p144
      $region30: #{net_tanh_forward.1} parent=11 // pred_check_branch
        %220 = sbr.rel (%p218) target = $region32
      $region31: #{net_tanh_forward.1} parent=11 // pred_region
        _
      $region32: #{net_tanh_forward.1} parent=11 // pred_fallthru
        _
      // Predicated region
      $region33: #{net_tanh_forward.1} parent=11 // pred_check
        %p221 = pneg %p165
      $region34: #{net_tanh_forward.1} parent=11 // pred_check_branch
        %223 = sbr.rel (%p221) target = $region36
      $region35: #{net_tanh_forward.1} parent=11 // pred_region
        _
      $region36: #{net_tanh_forward.1} parent=11 // pred_fallthru
        _
    $region12: #{net_tanh_forward.1} parent=5 // pred_fallthru
      _
    %p224 = scmp.lt.s32.totalorder %s13, 2
    // Predicated region
    $region37: #{net_tanh_forward.1} parent=5 // pred_check
      %p225 = pneg %p224
    $region38: #{net_tanh_forward.1} parent=5 // pred_check_branch
      %227 = sbr.rel (%p225) target = $region40
    $region39: #{net_tanh_forward.1} parent=5 // pred_region
      // Predicated region
      $region41: #{net_tanh_forward.1} parent=39 // pred_check
        %p228 = pneg %p33
      $region42: #{net_tanh_forward.1} parent=39 // pred_check_branch
        %230 = sbr.rel (%p228) target = $region44
      $region43: #{net_tanh_forward.1} parent=39 // pred_region
        %s231 = smul.u32 16, %s13
        %p232 = scmp.lt.s32.totalorder %s231, 31
        %s233 = scalar_select %p232, %s231, 31
        %s234 = smul.addr %s233, 8
        %s235 = scalar_lea.vmem %s0, %s234
        %s236 = smul.u32 16, %s13
      $region44: #{net_tanh_forward.1} parent=39 // pred_fallthru
        _
    $region40: #{net_tanh_forward.1} parent=5 // pred_fallthru
      _
    %p237 = scmp.le.s32.totalorder 1, %s13
    %p238 = scmp.lt.s32.totalorder %s13, 3
    %p239 = pnand %p237, %p238
    %p240 = pneg %p239
    // Predicated region
    $region45: #{net_tanh_forward.1} parent=5 // pred_check
      _
    $region46: #{net_tanh_forward.1} parent=5 // pred_check_branch
      %242 = sbr.rel (%p239) target = $region48
    $region47: #{net_tanh_forward.1} parent=5 // pred_region
      %s243 = ssub.s32 %s13, 1
      %s244 = smul.u32 16, %s18
      %p245 = scmp.lt.s32.totalorder %s244, 31
      %s246 = scalar_select %p245, %s244, 31
      %s247 = smul.addr %s246, 8
      %s248 = scalar_lea.vmem %s0, %s247
      %p249 = pneg %p39
      %p250 = pneg %p36
      %p251 = pneg %p60
      %p252 = pneg %p57
      %p253 = pneg %p81
      %p254 = pneg %p78
      %p255 = pneg %p102
      %p256 = pneg %p99
      %p257 = pneg %p123
      %p258 = pneg %p120
      %p259 = pneg %p144
      %p260 = pneg %p141
      %p261 = pneg %p165
      %p262 = pneg %p162
      %p263 = pneg %p191
      %p264 = pneg %p188
      %s265 = smul.u32 16, %s18
      %p266 = scmp.lt.s32.totalorder %s265, 31
      %s267 = scalar_select %p266, %s265, 31
      %s268 = smul.addr %s267, 8
      %s269 = scalar_lea.vmem %s7, %s268
      %s270 = smul.u32 16, %s18
      %p271 = scmp.lt.s32.totalorder %s270, 31
      %s272 = scalar_select %p271, %s270, 31
      %s273 = smul.addr %s272, 8
      %s274 = scalar_lea.vmem %s0, %s273
      %s275 = smul.u32 16, %s18
      %s276 = smul.u32 16, %s18
      %p277 = scmp.lt.s32.totalorder %s276, 31
      %s278 = scalar_select %p277, %s276, 31
      %s279 = smul.addr %s278, 8
      %s280 = scalar_lea.vmem %s7, %s279
      %s281 = smul.u32 16, %s18
      %v283 = vld [vmem:[%s274] sm:$0xff]
      %v284 = vld [vmem:[%s274 + $0x8] sm:$0xff]
      %v285 = vld [vmem:[%s274 + $0x10] sm:$0xff]
      %v286 = vld [vmem:[%s274 + $0x18] sm:$0xff]
      %v287 = vld [vmem:[%s274 + $0x20] sm:$0xff]
      %v288 = vld [vmem:[%s274 + $0x28] sm:$0xff]
      %v289 = vld [vmem:[%s274 + $0x30] sm:$0xff]
      %v290 = vld [vmem:[%s274 + $0x38] sm:$0xff]
      %v291 = vld [vmem:[%s274 + $0x40] sm:$0xff]
      %v292 = vld [vmem:[%s274 + $0x48] sm:$0xff]
      %v293 = vld [vmem:[%s274 + $0x50] sm:$0xff]
      %v294 = vld [vmem:[%s274 + $0x58] sm:$0xff]
      %v295 = vld [vmem:[%s274 + $0x60] sm:$0xff]
      %v296 = vld [vmem:[%s274 + $0x68] sm:$0xff]
      %v297 = vld [vmem:[%s274 + $0x70] sm:$0xff]
      %v298 = vld [vmem:[%s274 + $0x78] sm:$0xff]
      %v299 = vpack.c.bf16 %v284, %v283
      %v300 = vpack.c.bf16 %v286, %v285
      %v301 = vpack.c.bf16 %v288, %v287
      %v302 = vpack.c.bf16 %v290, %v289
      %v303 = vpack.c.bf16 %v292, %v291
      %v304 = vpack.c.bf16 %v294, %v293
      %v305 = vpack.c.bf16 %v296, %v295
      %v306 = vpack.c.bf16 %v298, %v297
      %v307 = vld [vmem:[%s1] sm:$0xf]
      %v308 = vld [vmem:[%s1 + $0x4] sm:$0xf]
      %v309 = vld [vmem:[%s1 + $0x8] sm:$0xf]
      %v310 = vld [vmem:[%s1 + $0xc] sm:$0xf]
      %v311 = vld [vmem:[%s1 + $0x10] sm:$0xf]
      %v312 = vld [vmem:[%s1 + $0x14] sm:$0xf]
      %v313 = vld [vmem:[%s1 + $0x18] sm:$0xf]
      %v314 = vld [vmem:[%s1 + $0x1c] sm:$0xf]
      %v315 = vld [vmem:[%s2] sm:$0x1]
      %v317 = vlaneseq
      %v318 = vshrl.u32 %v317, 7
      %v319 = vsub.s32 0, %v318
      %v320 = vrot.slane %v315, %v319
      %v330 = vunpack.c.l.b16 %v307
      %v331 = vunpack.c.l.b16 %v308
      %v332 = vunpack.c.l.b16 %v309
      %v333 = vunpack.c.l.b16 %v310
      %v334 = vunpack.c.l.b16 %v311
      %v335 = vunpack.c.l.b16 %v312
      %v336 = vunpack.c.l.b16 %v313
      %v337 = vunpack.c.l.b16 %v314
      %v338 = vpack.c.b16 %v331, %v330
      %v339 = vpack.c.b16 %v333, %v332
      %v340 = vpack.c.b16 %v335, %v334
      %v341 = vpack.c.b16 %v337, %v336
      %vm346 = vcmask 523264
      %v348 = vsel %vm346, %v299, 0
      %v351 = vsel %vm346, %v300, 0
      %v354 = vsel %vm346, %v301, 0
      %v357 = vsel %vm346, %v302, 0
      %v360 = vsel %vm346, %v303, 0
      %v363 = vsel %vm346, %v304, 0
      %v366 = vsel %vm346, %v305, 0
      %v369 = vsel %vm346, %v306, 0
      %371 = vmatprep.subr.bf16.mxu0 0
      %372 = vmatpush1.bf16.msra.mxu0 %v338
      %373 = vmatprep.subr.bf16.mxu0 0
      %374 = vmatpush1.bf16.msra.mxu0 %v339
      %375 = vmatprep.subr.bf16.mxu0 0
      %376 = vmatpush1.bf16.msra.mxu0 %v340
      %377 = vmatprep.subr.bf16.mxu0 0
      %378 = vmatpush1.bf16.msra.mxu0 %v341
      %379 = vmatprep.subr.bf16.mxu0 0
      %380 = vmatpush1.bf16.msra.mxu0 0
      %381 = vmatprep.subr.bf16.mxu0 0
      %382 = vmatpush1.bf16.msra.mxu0 0
      %383 = vmatprep.subr.bf16.mxu0 0
      %384 = vmatpush1.bf16.msra.mxu0 0
      %385 = vmatprep.subr.bf16.mxu0 0
      %386 = vmatpush1.bf16.msra.mxu0 0
      %387 = vmatprep.subr.bf16.mxu0 0
      %388 = vmatpush1.bf16.msra.mxu0 0
      %389 = vmatprep.subr.bf16.mxu0 0
      %390 = vmatpush1.bf16.msra.mxu0 0
      %391 = vmatprep.subr.bf16.mxu0 0
      %392 = vmatpush1.bf16.msra.mxu0 0
      %393 = vmatprep.subr.bf16.mxu0 0
      %394 = vmatpush1.bf16.msra.mxu0 0
      %395 = vmatprep.subr.bf16.mxu0 0
      %396 = vmatpush1.bf16.msra.mxu0 0
      %397 = vmatprep.subr.bf16.mxu0 0
      %398 = vmatpush1.bf16.msra.mxu0 0
      %399 = vmatprep.subr.bf16.mxu0 0
      %400 = vmatpush1.bf16.msra.mxu0 0
      %401 = vmatprep.subr.bf16.mxu0 0
      %402 = vmatpush1.bf16.msra.mxu0 0
      %403 = vmatprep.mubr.bf16.mxu0 0
      %404 = vmatmul.mubr.bf16.gmra.mrb[0].mxu0 %v348
      %v405 = vpop.f32.mrb[0].mxu0
      %v406 = vadd.f32 %v320, %v405
      %v407 = vpop.f32.mrb[0].mxu0
      %v408 = vpop.f32.mrb[0].mxu0
      %v409 = vadd.f32 %v320, %v408
      %v410 = vpop.f32.mrb[0].mxu0
      %411 = vmatprep.mubr.bf16.mxu0 0
      %412 = vmatmul.mubr.bf16.gmra.mrb[0].mxu0 %v351
      %v413 = vpop.f32.mrb[0].mxu0
      %v414 = vadd.f32 %v320, %v413
      %v415 = vpop.f32.mrb[0].mxu0
      %v416 = vpop.f32.mrb[0].mxu0
      %v417 = vadd.f32 %v320, %v416
      %v418 = vpop.f32.mrb[0].mxu0
      %419 = vmatprep.mubr.bf16.mxu0 0
      %420 = vmatmul.mubr.bf16.gmra.mrb[0].mxu0 %v354
      %v421 = vpop.f32.mrb[0].mxu0
      %v422 = vadd.f32 %v320, %v421
      %v423 = vpop.f32.mrb[0].mxu0
      %v424 = vpop.f32.mrb[0].mxu0
      %v425 = vadd.f32 %v320, %v424
      %v426 = vpop.f32.mrb[0].mxu0
      %427 = vmatprep.mubr.bf16.mxu0 0
      %428 = vmatmul.mubr.bf16.gmra.mrb[0].mxu0 %v357
      %v429 = vpop.f32.mrb[0].mxu0
      %v430 = vadd.f32 %v320, %v429
      %v431 = vpop.f32.mrb[0].mxu0
      %v432 = vpop.f32.mrb[0].mxu0
      %v433 = vadd.f32 %v320, %v432
      %v434 = vpop.f32.mrb[0].mxu0
      %435 = vmatprep.mubr.bf16.mxu0 0
      %436 = vmatmul.mubr.bf16.gmra.mrb[0].mxu0 %v360
      %v437 = vpop.f32.mrb[0].mxu0
      %v438 = vadd.f32 %v320, %v437
      %v439 = vpop.f32.mrb[0].mxu0
      %v440 = vpop.f32.mrb[0].mxu0
      %v441 = vadd.f32 %v320, %v440
      %v442 = vpop.f32.mrb[0].mxu0
      %443 = vmatprep.mubr.bf16.mxu0 0
      %444 = vmatmul.mubr.bf16.gmra.mrb[0].mxu0 %v363
      %v445 = vpop.f32.mrb[0].mxu0
      %v446 = vadd.f32 %v320, %v445
      %v447 = vpop.f32.mrb[0].mxu0
      %v448 = vpop.f32.mrb[0].mxu0
      %v449 = vadd.f32 %v320, %v448
      %v450 = vpop.f32.mrb[0].mxu0
      %451 = vmatprep.mubr.bf16.mxu0 0
      %452 = vmatmul.mubr.bf16.gmra.mrb[0].mxu0 %v366
      %v453 = vpop.f32.mrb[0].mxu0
      %v454 = vadd.f32 %v320, %v453
      %v455 = vpop.f32.mrb[0].mxu0
      %v456 = vpop.f32.mrb[0].mxu0
      %v457 = vadd.f32 %v320, %v456
      %v458 = vpop.f32.mrb[0].mxu0
      %459 = vmatprep.mubr.bf16.mxu0 0
      %460 = vmatmul.mubr.bf16.gmra.mrb[0].mxu0 %v369
      %v461 = vpop.f32.mrb[0].mxu0
      %v462 = vadd.f32 %v320, %v461
      %v463 = vpop.f32.mrb[0].mxu0
      %v464 = vpop.f32.mrb[0].mxu0
      %v465 = vadd.f32 %v320, %v464
      %v466 = vpop.f32.mrb[0].mxu0
      %467 = vdwg.mxu0
      %v468 = vtanh.pop %v406
      %v469 = vtanh.pop %v409
      %v470 = vtanh.pop %v414
      %v471 = vtanh.pop %v417
      %v472 = vtanh.pop %v422
      %v473 = vtanh.pop %v425
      %v474 = vtanh.pop %v430
      %v475 = vtanh.pop %v433
      %v476 = vtanh.pop %v438
      %v477 = vtanh.pop %v441
      %v478 = vtanh.pop %v446
      %v479 = vtanh.pop %v449
      %v480 = vtanh.pop %v454
      %v481 = vtanh.pop %v457
      %v482 = vtanh.pop %v462
      %v483 = vtanh.pop %v465
      %v484 = vpack.c.bf16 %v469, %v468
      %v485 = vpack.c.bf16 %v471, %v470
      %v486 = vpack.c.bf16 %v473, %v472
      %v487 = vpack.c.bf16 %v475, %v474
      %v488 = vpack.c.bf16 %v477, %v476
      %v489 = vpack.c.bf16 %v479, %v478
      %v490 = vpack.c.bf16 %v481, %v480
      %v491 = vpack.c.bf16 %v483, %v482
      %v492 = vld [vmem:[%s3] sm:$0xf]
      %v493 = vld [vmem:[%s3 + $0x4] sm:$0xf]
      %v494 = vld [vmem:[%s3 + $0x8] sm:$0xf]
      %v495 = vld [vmem:[%s3 + $0xc] sm:$0xf]
      %v496 = vld [vmem:[%s3 + $0x10] sm:$0xf]
      %v497 = vld [vmem:[%s3 + $0x14] sm:$0xf]
      %v498 = vld [vmem:[%s3 + $0x18] sm:$0xf]
      %v499 = vld [vmem:[%s3 + $0x1c] sm:$0xf]
      %v500 = vld [vmem:[%s3 + $0x20] sm:$0xf]
      %v501 = vld [vmem:[%s3 + $0x24] sm:$0xf]
      %v502 = vld [vmem:[%s3 + $0x28] sm:$0xf]
      %v503 = vld [vmem:[%s3 + $0x2c] sm:$0xf]
      %v504 = vld [vmem:[%s3 + $0x30] sm:$0xf]
      %v505 = vld [vmem:[%s3 + $0x34] sm:$0xf]
      %v506 = vld [vmem:[%s3 + $0x38] sm:$0xf]
      %v507 = vld [vmem:[%s3 + $0x3c] sm:$0xf]
      %v508 = vld [vmem:[%s4] sm:$0x1]
      %v510 = vlaneseq
      %v511 = vshrl.u32 %v510, 7
      %v512 = vsub.s32 0, %v511
      %v513 = vrot.slane %v508, %v512
      %v531 = vunpack.c.l.b16 %v492
      %v532 = vunpack.c.l.b16 %v493
      %v533 = vunpack.c.l.b16 %v494
      %v534 = vunpack.c.l.b16 %v495
      %v535 = vunpack.c.l.b16 %v496
      %v536 = vunpack.c.l.b16 %v497
      %v537 = vunpack.c.l.b16 %v498
      %v538 = vunpack.c.l.b16 %v499
      %v539 = vunpack.c.l.b16 %v500
      %v540 = vunpack.c.l.b16 %v501
      %v541 = vunpack.c.l.b16 %v502
      %v542 = vunpack.c.l.b16 %v503
      %v543 = vunpack.c.l.b16 %v504
      %v544 = vunpack.c.l.b16 %v505
      %v545 = vunpack.c.l.b16 %v506
      %v546 = vunpack.c.l.b16 %v507
      %v547 = vpack.c.b16 %v532, %v531
      %v548 = vpack.c.b16 %v534, %v533
      %v549 = vpack.c.b16 %v536, %v535
      %v550 = vpack.c.b16 %v538, %v537
      %v551 = vpack.c.b16 %v540, %v539
      %v552 = vpack.c.b16 %v542, %v541
      %v553 = vpack.c.b16 %v544, %v543
      %v554 = vpack.c.b16 %v546, %v545
      %563 = vmatprep.subr.bf16.mxu0 0
      %564 = vmatpush1.bf16.msra.mxu0 %v547
      %565 = vmatprep.subr.bf16.mxu0 0
      %566 = vmatpush1.bf16.msra.mxu0 %v548
      %567 = vmatprep.subr.bf16.mxu0 0
      %568 = vmatpush1.bf16.msra.mxu0 %v549
      %569 = vmatprep.subr.bf16.mxu0 0
      %570 = vmatpush1.bf16.msra.mxu0 %v550
      %571 = vmatprep.subr.bf16.mxu0 0
      %572 = vmatpush1.bf16.msra.mxu0 %v551
      %573 = vmatprep.subr.bf16.mxu0 0
      %574 = vmatpush1.bf16.msra.mxu0 %v552
      %575 = vmatprep.subr.bf16.mxu0 0
      %576 = vmatpush1.bf16.msra.mxu0 %v553
      %577 = vmatprep.subr.bf16.mxu0 0
      %578 = vmatpush1.bf16.msra.mxu0 %v554
      %579 = vmatprep.subr.bf16.mxu0 0
      %580 = vmatpush1.bf16.msra.mxu0 0
      %581 = vmatprep.subr.bf16.mxu0 0
      %582 = vmatpush1.bf16.msra.mxu0 0
      %583 = vmatprep.subr.bf16.mxu0 0
      %584 = vmatpush1.bf16.msra.mxu0 0
      %585 = vmatprep.subr.bf16.mxu0 0
      %586 = vmatpush1.bf16.msra.mxu0 0
      %587 = vmatprep.subr.bf16.mxu0 0
      %588 = vmatpush1.bf16.msra.mxu0 0
      %589 = vmatprep.subr.bf16.mxu0 0
      %590 = vmatpush1.bf16.msra.mxu0 0
      %591 = vmatprep.subr.bf16.mxu0 0
      %592 = vmatpush1.bf16.msra.mxu0 0
      %593 = vmatprep.subr.bf16.mxu0 0
      %594 = vmatpush1.bf16.msra.mxu0 0
      %595 = vmatprep.mubr.bf16.mxu0 0
      %596 = vmatmul.mubr.bf16.gmra.mrb[0].mxu0 %v484
      %v597 = vpop.f32.mrb[0].mxu0
      %v598 = vadd.f32 %v513, %v597
      %v599 = vpop.f32.mrb[0].mxu0
      %v600 = vpop.f32.mrb[0].mxu0
      %v601 = vadd.f32 %v513, %v600
      %v602 = vpop.f32.mrb[0].mxu0
      %603 = vmatprep.mubr.bf16.mxu0 0
      %604 = vmatmul.mubr.bf16.gmra.mrb[0].mxu0 %v485
      %v605 = vpop.f32.mrb[0].mxu0
      %v606 = vadd.f32 %v513, %v605
      %v607 = vpop.f32.mrb[0].mxu0
      %v608 = vpop.f32.mrb[0].mxu0
      %v609 = vadd.f32 %v513, %v608
      %v610 = vpop.f32.mrb[0].mxu0
      %611 = vmatprep.mubr.bf16.mxu0 0
      %612 = vmatmul.mubr.bf16.gmra.mrb[0].mxu0 %v486
      %v613 = vpop.f32.mrb[0].mxu0
      %v614 = vadd.f32 %v513, %v613
      %v615 = vpop.f32.mrb[0].mxu0
      %v616 = vpop.f32.mrb[0].mxu0
      %v617 = vadd.f32 %v513, %v616
      %v618 = vpop.f32.mrb[0].mxu0
      %619 = vmatprep.mubr.bf16.mxu0 0
      %620 = vmatmul.mubr.bf16.gmra.mrb[0].mxu0 %v487
      %v621 = vpop.f32.mrb[0].mxu0
      %v622 = vadd.f32 %v513, %v621
      %v623 = vpop.f32.mrb[0].mxu0
      %v624 = vpop.f32.mrb[0].mxu0
      %v625 = vadd.f32 %v513, %v624
      %v626 = vpop.f32.mrb[0].mxu0
      %627 = vmatprep.mubr.bf16.mxu0 0
      %628 = vmatmul.mubr.bf16.gmra.mrb[0].mxu0 %v488
      %v629 = vpop.f32.mrb[0].mxu0
      %v630 = vadd.f32 %v513, %v629
      %v631 = vpop.f32.mrb[0].mxu0
      %v632 = vpop.f32.mrb[0].mxu0
      %v633 = vadd.f32 %v513, %v632
      %v634 = vpop.f32.mrb[0].mxu0
      %635 = vmatprep.mubr.bf16.mxu0 0
      %636 = vmatmul.mubr.bf16.gmra.mrb[0].mxu0 %v489
      %v637 = vpop.f32.mrb[0].mxu0
      %v638 = vadd.f32 %v513, %v637
      %v639 = vpop.f32.mrb[0].mxu0
      %v640 = vpop.f32.mrb[0].mxu0
      %v641 = vadd.f32 %v513, %v640
      %v642 = vpop.f32.mrb[0].mxu0
      %643 = vmatprep.mubr.bf16.mxu0 0
      %644 = vmatmul.mubr.bf16.gmra.mrb[0].mxu0 %v490
      %v645 = vpop.f32.mrb[0].mxu0
      %v646 = vadd.f32 %v513, %v645
      %v647 = vpop.f32.mrb[0].mxu0
      %v648 = vpop.f32.mrb[0].mxu0
      %v649 = vadd.f32 %v513, %v648
      %v650 = vpop.f32.mrb[0].mxu0
      %651 = vmatprep.mubr.bf16.mxu0 0
      %652 = vmatmul.mubr.bf16.gmra.mrb[0].mxu0 %v491
      %v653 = vpop.f32.mrb[0].mxu0
      %v654 = vadd.f32 %v513, %v653
      %v655 = vpop.f32.mrb[0].mxu0
      %v656 = vpop.f32.mrb[0].mxu0
      %v657 = vadd.f32 %v513, %v656
      %v658 = vpop.f32.mrb[0].mxu0
      %659 = vdwg.mxu0
      %v660 = vtanh.pop %v598
      %v661 = vtanh.pop %v601
      %v662 = vtanh.pop %v606
      %v663 = vtanh.pop %v609
      %v664 = vtanh.pop %v614
      %v665 = vtanh.pop %v617
      %v666 = vtanh.pop %v622
      %v667 = vtanh.pop %v625
      %v668 = vtanh.pop %v630
      %v669 = vtanh.pop %v633
      %v670 = vtanh.pop %v638
      %v671 = vtanh.pop %v641
      %v672 = vtanh.pop %v646
      %v673 = vtanh.pop %v649
      %v674 = vtanh.pop %v654
      %v675 = vtanh.pop %v657
      %v676 = vpack.c.bf16 %v661, %v660
      %v677 = vpack.c.bf16 %v663, %v662
      %v678 = vpack.c.bf16 %v665, %v664
      %v679 = vpack.c.bf16 %v667, %v666
      %v680 = vpack.c.bf16 %v669, %v668
      %v681 = vpack.c.bf16 %v671, %v670
      %v682 = vpack.c.bf16 %v673, %v672
      %v683 = vpack.c.bf16 %v675, %v674
      %v684 = vld [vmem:[%s5] sm:$0xf]
      %v685 = vld [vmem:[%s5 + $0x4] sm:$0xf]
      %v686 = vld [vmem:[%s5 + $0x8] sm:$0xf]
      %v687 = vld [vmem:[%s5 + $0xc] sm:$0xf]
      %v688 = vld [vmem:[%s5 + $0x10] sm:$0xf]
      %v689 = vld [vmem:[%s5 + $0x14] sm:$0xf]
      %v690 = vld [vmem:[%s5 + $0x18] sm:$0xf]
      %v691 = vld [vmem:[%s5 + $0x1c] sm:$0xf]
      %v692 = vld [vmem:[%s5 + $0x20] sm:$0xf]
      %v693 = vld [vmem:[%s5 + $0x24] sm:$0xf]
      %v694 = vld [vmem:[%s5 + $0x28] sm:$0xf]
      %v695 = vld [vmem:[%s5 + $0x2c] sm:$0xf]
      %v696 = vld [vmem:[%s5 + $0x30] sm:$0xf]
      %v697 = vld [vmem:[%s5 + $0x34] sm:$0xf]
      %v698 = vld [vmem:[%s5 + $0x38] sm:$0xf]
      %v699 = vld [vmem:[%s5 + $0x3c] sm:$0xf]
      %v700 = vld [vmem:[%s6] sm:$0x1]
      %v702 = vlaneseq
      %v703 = vshrl.u32 %v702, 7
      %v704 = vsub.s32 0, %v703
      %v705 = vrot.slane %v700, %v704
      %v723 = vunpack.c.l.b16 %v684
      %v724 = vunpack.c.l.b16 %v685
      %v725 = vunpack.c.l.b16 %v686
      %v726 = vunpack.c.l.b16 %v687
      %v727 = vunpack.c.l.b16 %v688
      %v728 = vunpack.c.l.b16 %v689
      %v729 = vunpack.c.l.b16 %v690
      %v730 = vunpack.c.l.b16 %v691
      %v731 = vunpack.c.l.b16 %v692
      %v732 = vunpack.c.l.b16 %v693
      %v733 = vunpack.c.l.b16 %v694
      %v734 = vunpack.c.l.b16 %v695
      %v735 = vunpack.c.l.b16 %v696
      %v736 = vunpack.c.l.b16 %v697
      %v737 = vunpack.c.l.b16 %v698
      %v738 = vunpack.c.l.b16 %v699
      %v739 = vpack.c.b16 %v724, %v723
      %v740 = vpack.c.b16 %v726, %v725
      %v741 = vpack.c.b16 %v728, %v727
      %v742 = vpack.c.b16 %v730, %v729
      %v743 = vpack.c.b16 %v732, %v731
      %v744 = vpack.c.b16 %v734, %v733
      %v745 = vpack.c.b16 %v736, %v735
      %v746 = vpack.c.b16 %v738, %v737
      %755 = vmatprep.subr.bf16.mxu0 0
      %756 = vmatpush1.bf16.msra.mxu0 %v739
      %757 = vmatprep.subr.bf16.mxu0 0
      %758 = vmatpush1.bf16.msra.mxu0 %v740
      %759 = vmatprep.subr.bf16.mxu0 0
      %760 = vmatpush1.bf16.msra.mxu0 %v741
      %761 = vmatprep.subr.bf16.mxu0 0
      %762 = vmatpush1.bf16.msra.mxu0 %v742
      %763 = vmatprep.subr.bf16.mxu0 0
      %764 = vmatpush1.bf16.msra.mxu0 %v743
      %765 = vmatprep.subr.bf16.mxu0 0
      %766 = vmatpush1.bf16.msra.mxu0 %v744
      %767 = vmatprep.subr.bf16.mxu0 0
      %768 = vmatpush1.bf16.msra.mxu0 %v745
      %769 = vmatprep.subr.bf16.mxu0 0
      %770 = vmatpush1.bf16.msra.mxu0 %v746
      %771 = vmatprep.subr.bf16.mxu0 0
      %772 = vmatpush1.bf16.msra.mxu0 0
      %773 = vmatprep.subr.bf16.mxu0 0
      %774 = vmatpush1.bf16.msra.mxu0 0
      %775 = vmatprep.subr.bf16.mxu0 0
      %776 = vmatpush1.bf16.msra.mxu0 0
      %777 = vmatprep.subr.bf16.mxu0 0
      %778 = vmatpush1.bf16.msra.mxu0 0
      %779 = vmatprep.subr.bf16.mxu0 0
      %780 = vmatpush1.bf16.msra.mxu0 0
      %781 = vmatprep.subr.bf16.mxu0 0
      %782 = vmatpush1.bf16.msra.mxu0 0
      %783 = vmatprep.subr.bf16.mxu0 0
      %784 = vmatpush1.bf16.msra.mxu0 0
      %785 = vmatprep.subr.bf16.mxu0 0
      %786 = vmatpush1.bf16.msra.mxu0 0
      %787 = vmatprep.mubr.bf16.mxu0 0
      %788 = vmatmul.mubr.bf16.gmra.mrb[0].mxu0 %v676
      %v789 = vpop.f32.mrb[0].mxu0
      %v790 = vadd.f32 %v705, %v789
      %v791 = vpop.f32.mrb[0].mxu0
      %v792 = vpop.f32.mrb[0].mxu0
      %v793 = vadd.f32 %v705, %v792
      %v794 = vpop.f32.mrb[0].mxu0
      %795 = vmatprep.mubr.bf16.mxu0 0
      %796 = vmatmul.mubr.bf16.gmra.mrb[0].mxu0 %v677
      %v797 = vpop.f32.mrb[0].mxu0
      %v798 = vadd.f32 %v705, %v797
      %v799 = vpop.f32.mrb[0].mxu0
      %v800 = vpop.f32.mrb[0].mxu0
      %v801 = vadd.f32 %v705, %v800
      %v802 = vpop.f32.mrb[0].mxu0
      %803 = vmatprep.mubr.bf16.mxu0 0
      %804 = vmatmul.mubr.bf16.gmra.mrb[0].mxu0 %v678
      %v805 = vpop.f32.mrb[0].mxu0
      %v806 = vadd.f32 %v705, %v805
      %v807 = vpop.f32.mrb[0].mxu0
      %v808 = vpop.f32.mrb[0].mxu0
      %v809 = vadd.f32 %v705, %v808
      %v810 = vpop.f32.mrb[0].mxu0
      %811 = vmatprep.mubr.bf16.mxu0 0
      %812 = vmatmul.mubr.bf16.gmra.mrb[0].mxu0 %v679
      %v813 = vpop.f32.mrb[0].mxu0
      %v814 = vadd.f32 %v705, %v813
      %v815 = vpop.f32.mrb[0].mxu0
      %v816 = vpop.f32.mrb[0].mxu0
      %v817 = vadd.f32 %v705, %v816
      %v818 = vpop.f32.mrb[0].mxu0
      %819 = vmatprep.mubr.bf16.mxu0 0
      %820 = vmatmul.mubr.bf16.gmra.mrb[0].mxu0 %v680
      %v821 = vpop.f32.mrb[0].mxu0
      %v822 = vadd.f32 %v705, %v821
      %v823 = vpop.f32.mrb[0].mxu0
      %v824 = vpop.f32.mrb[0].mxu0
      %v825 = vadd.f32 %v705, %v824
      %v826 = vpop.f32.mrb[0].mxu0
      %827 = vmatprep.mubr.bf16.mxu0 0
      %828 = vmatmul.mubr.bf16.gmra.mrb[0].mxu0 %v681
      %v829 = vpop.f32.mrb[0].mxu0
      %v830 = vadd.f32 %v705, %v829
      %v831 = vpop.f32.mrb[0].mxu0
      %v832 = vpop.f32.mrb[0].mxu0
      %v833 = vadd.f32 %v705, %v832
      %v834 = vpop.f32.mrb[0].mxu0
      %835 = vmatprep.mubr.bf16.mxu0 0
      %836 = vmatmul.mubr.bf16.gmra.mrb[0].mxu0 %v682
      %v837 = vpop.f32.mrb[0].mxu0
      %v838 = vadd.f32 %v705, %v837
      %v839 = vpop.f32.mrb[0].mxu0
      %v840 = vpop.f32.mrb[0].mxu0
      %v841 = vadd.f32 %v705, %v840
      %v842 = vpop.f32.mrb[0].mxu0
      %843 = vmatprep.mubr.bf16.mxu0 0
      %844 = vmatmul.mubr.bf16.gmra.mrb[0].mxu0 %v683
      %v845 = vpop.f32.mrb[0].mxu0
      %v846 = vadd.f32 %v705, %v845
      %v847 = vpop.f32.mrb[0].mxu0
      %v848 = vpop.f32.mrb[0].mxu0
      %v849 = vadd.f32 %v705, %v848
      %v850 = vpop.f32.mrb[0].mxu0
      %851 = vdwg.mxu0
      %vm852 = vcmask 80896
      %853 = vst.msk [vmem:[%s280] sm:$0xff] %vm852, %v790
      %854 = vst.msk [vmem:[%s280 + $0x8] sm:$0xff] %vm852, %v793
      %855 = vst.msk [vmem:[%s280 + $0x10] sm:$0xff] %vm852, %v798
      %856 = vst.msk [vmem:[%s280 + $0x18] sm:$0xff] %vm852, %v801
      %857 = vst.msk [vmem:[%s280 + $0x20] sm:$0xff] %vm852, %v806
      %858 = vst.msk [vmem:[%s280 + $0x28] sm:$0xff] %vm852, %v809
      %859 = vst.msk [vmem:[%s280 + $0x30] sm:$0xff] %vm852, %v814
      %860 = vst.msk [vmem:[%s280 + $0x38] sm:$0xff] %vm852, %v817
      %861 = vst.msk [vmem:[%s280 + $0x40] sm:$0xff] %vm852, %v822
      %862 = vst.msk [vmem:[%s280 + $0x48] sm:$0xff] %vm852, %v825
      %863 = vst.msk [vmem:[%s280 + $0x50] sm:$0xff] %vm852, %v830
      %864 = vst.msk [vmem:[%s280 + $0x58] sm:$0xff] %vm852, %v833
      %865 = vst.msk [vmem:[%s280 + $0x60] sm:$0xff] %vm852, %v838
      %866 = vst.msk [vmem:[%s280 + $0x68] sm:$0xff] %vm852, %v841
      %867 = vst.msk [vmem:[%s280 + $0x70] sm:$0xff] %vm852, %v846
      %868 = vst.msk [vmem:[%s280 + $0x78] sm:$0xff] %vm852, %v849
      %s869 = smul.u32 16, %s18
      %p870 = scmp.lt.s32.totalorder %s869, 31
      %s871 = scalar_select %p870, %s869, 31
      %s872 = smul.addr %s871, 8
      %s873 = scalar_lea.vmem %s7, %s872
      // Predicated region
      $region49: #{net_tanh_forward.1} parent=47 // pred_check
        %p874 = pneg %p188
      $region50: #{net_tanh_forward.1} parent=47 // pred_check_branch
        %876 = sbr.rel (%p874) target = $region52
      $region51: #{net_tanh_forward.1} parent=47 // pred_region
        %s877 = smul.u32 16, %s18
      $region52: #{net_tanh_forward.1} parent=47 // pred_fallthru
        _
    $region48: #{net_tanh_forward.1} parent=5 // pred_fallthru
      _
    %p878 = scmp.le.s32.totalorder 2, %s13
    // Predicated region
    $region53: #{net_tanh_forward.1} parent=5 // pred_check
      %p879 = pneg %p878
    $region54: #{net_tanh_forward.1} parent=5 // pred_check_branch
      %881 = sbr.rel (%p879) target = $region56
    $region55: #{net_tanh_forward.1} parent=5 // pred_region
      %s882 = ssub.s32 %s13, 2
      // Predicated region
      $region57: #{net_tanh_forward.1} parent=55 // pred_check
        %p883 = pneg %p194
      $region58: #{net_tanh_forward.1} parent=55 // pred_check_branch
        %885 = sbr.rel (%p883) target = $region60
      $region59: #{net_tanh_forward.1} parent=55 // pred_region
        %s886 = smul.u32 16, %s19
        %p887 = scmp.lt.s32.totalorder %s886, 31
        %s888 = scalar_select %p887, %s886, 31
        %s889 = smul.addr %s888, 8
        %s890 = scalar_lea.vmem %s7, %s889
      $region60: #{net_tanh_forward.1} parent=55 // pred_fallthru
        _
    $region56: #{net_tanh_forward.1} parent=5 // pred_fallthru
      _
  $region6: #{net_tanh_forward.1} parent=0 // loop_footer
    %s17 = sadd.s32 1, %s13
  $region7: #{net_tanh_forward.1} parent=0 // loop_footer_branch
    %12 = sbr.rel target = $region3
  $region8: #{net_tanh_forward.1} parent=0 // loop_exit
    _

</llo_original>
